<compile_context>
chip_gen: v5e
topology: v5e:2x2
jax: 0.10.0
libtpu: 0.0.40
codegen_flags: <defaults>
</compile_context>

<pallas_src>
import jax
import jax.numpy as jnp
from jax.experimental import pallas as pl
from jax.experimental.pallas import tpu as pltpu


# ----------------------------- kernels --------------------------------------


def _patch_embed_kernel(x_ref, w_ref, b_ref, o_ref):
    # x_ref: (TM, Kp) streamed tile of flattened patches (compute dtype)
    # w_ref: (Kp, Dp) resident projection weight        (compute dtype)
    # b_ref: (1, Dp)  resident bias                     (f32)
    # o_ref: (TM, Dp) output tile                       (out dtype)
    acc = jnp.dot(x_ref[...], w_ref[...], preferred_element_type=jnp.float32)
    o_ref[...] = (acc + b_ref[...]).astype(o_ref.dtype)


def _patch_embed_kernel_ktiled(x_ref, w_ref, b_ref, o_ref, acc_ref):
    # Same as above, but K is a grid axis: accumulate in f32 VMEM scratch and
    # write the output (bias add + cast) only on the last K step.
    k = pl.program_id(1)

    @pl.when(k == 0)
    def _():
        acc_ref[...] = jnp.zeros_like(acc_ref)

    acc_ref[...] += jnp.dot(
        x_ref[...], w_ref[...], preferred_element_type=jnp.float32
    )

    @pl.when(k == pl.num_programs(1) - 1)
    def _():
        o_ref[...] = (acc_ref[...] + b_ref[...]).astype(o_ref.dtype)


# ----------------------------- planning helpers -----------------------------


def _round_up(v, m):
    return (v + m - 1) // m * m


def _cdiv(a, b):
    return (a + b - 1) // b


def _vmem_capacity_bytes():
    try:
        return int(pltpu.get_tpu_info().vmem_capacity_bytes)
    except Exception:
        return 64 * 1024 * 1024  # v7x-conservative fallback


def _tile_bytes(tm, tk, dp, in_bytes, out_bytes, ktiled):
    # Conservative accounting: weight counted double-buffered even though we
    # request pl.Buffered(1); x/out tiles double-buffered; f32 accumulator if
    # K is tiled.
    return (2 * tk * dp * in_bytes           # weight buffers
            + dp * 4                          # bias (f32)
            + 2 * tm * tk * in_bytes          # streamed patch tiles
            + 2 * tm * dp * out_bytes         # output tiles
            + (tm * dp * 4 if ktiled else 0))  # accumulator


def _plan_tiles(k128, dp, in_bytes, out_bytes, vmem_cap):
    """Pick (tm, tk); tk == k128 means no K grid axis (weight stays resident)."""
    budget = int(vmem_cap * 0.45)   # headroom for Mosaic scratch / misc

    tm = 1024
    while tm > 256 and _tile_bytes(tm, k128, dp, in_bytes, out_bytes, False) > budget:
        tm //= 2
    if _tile_bytes(tm, k128, dp, in_bytes, out_bytes, False) <= budget:
        return tm, k128

    # Resident weight does not fit: tile K rather than shrinking TM below 256.
    for tm_try in (512, 256):
        for tk_try in (2048, 1024, 512, 256, 128):
            if tk_try <= k128 and _tile_bytes(
                    tm_try, tk_try, dp, in_bytes, out_bytes, True) <= budget:
                return tm_try, tk_try
    return 256, 128  # last resort


# ----------------------------- public wrapper -------------------------------


def patch_embed(x, weight, bias, patch_size, *, compute_dtype=jnp.bfloat16,
                out_dtype=None, tm=None, tk=None):
    """
    x:      (B, C, H, W)   NCHW, like PyTorch
    weight: (D, C, p, p)   Conv2d weight (PyTorch OIHW layout)
    bias:   (D,)
    returns (tokens, (Hp, Wp)) with tokens: (B, Hp*Wp, D) in `out_dtype`
    (defaults to `compute_dtype` to halve writeback; pass out_dtype=jnp.float32
    for bit-for-bit PyTorch-style f32 outputs).
    """
    B, C, H, W = x.shape
    D = weight.shape[0]
    p = patch_size
    Hp, Wp = H // p, W // p
    M = B * Hp * Wp
    K = C * p * p
    out_dtype = compute_dtype if out_dtype is None else out_dtype

    in_bytes = jnp.dtype(compute_dtype).itemsize
    out_bytes = jnp.dtype(out_dtype).itemsize
    K128 = _round_up(K, 128)
    Dp = _round_up(D, 128)
    vmem_cap = _vmem_capacity_bytes()

    # ---- tile plan ---------------------------------------------------------
    auto_tm, auto_tk = _plan_tiles(K128, Dp, in_bytes, out_bytes, vmem_cap)
    tm_user = tm is not None
    tm = auto_tm if tm is None else tm
    tk = auto_tk if tk is None else max(128, _round_up(min(tk, K128), 128))

    m8 = _round_up(max(M, 8), 8)
    tm = max(8, min(_round_up(tm, 8), m8))
    if not tm_user:
        # Prefer an even number of M tiles: v7x has 2 TensorCores sharing HBM
        # and the M axis is "parallel"; an odd/single-step grid idles one core.
        steps = _cdiv(m8, tm)
        if steps % 2 == 1 and m8 >= 16:
            tm_even = _round_up(_cdiv(m8, steps + 1), 8)
            if _cdiv(m8, tm_even) % 2 == 0:
                tm = tm_even

    Kp = _round_up(K, tk)          # multiple of tk (and of 128)
    Mp = _round_up(M, tm)
    nm, nk = Mp // tm, Kp // tk
    ktiled = nk > 1

    # ---- patch extraction (host-side, fused into the call) ------------------
    x = x[:, :, :Hp * p, :Wp * p]
    patches = (x.astype(compute_dtype)                      # cast first: bf16 traffic only
               .reshape(B, C, Hp, p, Wp, p)
               .transpose(0, 2, 4, 1, 3, 5)                 # (B, Hp, Wp, C, p, p)
               .reshape(M, K))
    if (Mp, Kp) != (M, K):
        patches = jnp.pad(patches, ((0, Mp - M), (0, Kp - K)))

    # Conv weight (D, C, p, p) -> (K, D); flatten order matches (C, ph, pw).
    w_flat = weight.reshape(D, K).T.astype(compute_dtype)
    if (Kp, Dp) != (K, D):
        w_flat = jnp.pad(w_flat, ((0, Kp - K), (0, Dp - D)))
    b_flat = bias.astype(jnp.float32).reshape(1, D)
    if Dp != D:
        b_flat = jnp.pad(b_flat, ((0, 0), (0, Dp - D)))

    # ---- cost & VMEM limit ---------------------------------------------------
    cost = pl.CostEstimate(
        flops=2 * Mp * Kp * Dp,
        transcendentals=0,
        bytes_accessed=(Mp * Kp * in_bytes + Kp * Dp * in_bytes
                        + Dp * 4 + Mp * Dp * out_bytes),
    )
    need = _tile_bytes(tm, tk, Dp, in_bytes, out_bytes, ktiled)
    vmem_limit = int(max(32 * 1024 * 1024,
                         min(0.9 * vmem_cap, need + 8 * 1024 * 1024)))

    # ---- pallas_call ---------------------------------------------------------
    if not ktiled:
        kernel = _patch_embed_kernel
        grid = (nm,)
        in_specs = [
            pl.BlockSpec((tm, Kp), lambda i: (i, 0)),                 # streamed
            pl.BlockSpec((Kp, Dp), lambda i: (0, 0),
                         pipeline_mode=pl.Buffered(1)),               # resident
            pl.BlockSpec((1, Dp), lambda i: (0, 0),
                         pipeline_mode=pl.Buffered(1)),               # resident
        ]
        out_specs = pl.BlockSpec((tm, Dp), lambda i: (i, 0))
        scratch = []
        dims = ("parallel",)
    else:
        kernel = _patch_embed_kernel_ktiled
        grid = (nm, nk)
        in_specs = [
            pl.BlockSpec((tm, tk), lambda i, k: (i, k)),              # streamed
            pl.BlockSpec((tk, Dp), lambda i, k: (k, 0)),              # streamed over K
            pl.BlockSpec((1, Dp), lambda i, k: (0, 0),
                         pipeline_mode=pl.Buffered(1)),               # resident
        ]
        out_specs = pl.BlockSpec((tm, Dp), lambda i, k: (i, 0))
        scratch = [pltpu.VMEM((tm, Dp), jnp.float32)]
        dims = ("parallel", "arbitrary")

    out = pl.pallas_call(
        kernel,
        out_shape=jax.ShapeDtypeStruct((Mp, Dp), out_dtype),
        grid_spec=pltpu.PrefetchScalarGridSpec(
            num_scalar_prefetch=0,
            grid=grid,
            in_specs=in_specs,
            out_specs=out_specs,
            scratch_shapes=scratch,
        ),
        compiler_params=pltpu.CompilerParams(
            dimension_semantics=dims,
            vmem_limit_bytes=vmem_limit,
            allow_input_fusion=[True, False, False],
        ),
        cost_estimate=cost,
    )(patches, w_flat, b_flat)

    tokens = out[:M, :D].reshape(B, Hp * Wp, D)
    return tokens, (Hp, Wp)


# ----------------------------- self-test -------------------------------------


if __name__ == "__main__":
    def torch_ref(x, weight, bias, p):
        # nn.Conv2d(stride=kernel=p) + flatten(2).transpose(1, 2), in f32.
        D = weight.shape[0]
        conv = jax.lax.conv_general_dilated(
            x, weight, window_strides=(p, p), padding="VALID",
            dimension_numbers=("NCHW", "OIHW", "NCHW"),
        ) + bias.reshape(1, D, 1, 1)
        B, _, Hp, Wp = conv.shape
        return conv.reshape(B, D, Hp * Wp).transpose(0, 2, 1)

    # --- Test 1: exact-semantics path (f32 compute, f32 out) ----------------
    B, C, IMG, PATCH, EMBED = 2, 4, 16, 4, 32
    kx, kw, kb = jax.random.split(jax.random.PRNGKey(0), 3)
    x = jax.random.normal(kx, (B, C, IMG, IMG), dtype=jnp.float32)
    weight = jax.random.normal(kw, (EMBED, C, PATCH, PATCH), dtype=jnp.float32) * 0.02
    bias = jax.random.normal(kb, (EMBED,), dtype=jnp.float32) * 0.02
    ref = torch_ref(x, weight, bias, PATCH)
    Hp = Wp = IMG // PATCH

    tok_f32, (hp, wp) = patch_embed(x, weight, bias, PATCH,
                                    compute_dtype=jnp.float32,
                                    out_dtype=jnp.float32)
    tok_f32 = jax.block_until_ready(tok_f32)
    assert tok_f32.shape == (B, Hp * Wp, EMBED)
    assert (hp, wp) == (Hp, Wp)
    assert jnp.allclose(tok_f32, ref, atol=1e-4, rtol=1e-4)

    # --- Test 2: default perf path (bf16 compute, bf16 out) -----------------
    tok_bf16, _ = patch_embed(x, weight, bias, PATCH)
    tok_bf16 = jax.block_until_ready(tok_bf16)
    assert tok_bf16.dtype == jnp.bfloat16
    assert tok_bf16.shape == (B, Hp * Wp, EMBED)
    assert jnp.allclose(tok_bf16.astype(jnp.float32), ref, atol=2e-2, rtol=2e-2)

    # --- Test 3: force the K-tiled accumulator path (large-K guard) ---------
    B2, C2, IMG2, PATCH2, EMBED2 = 1, 8, 16, 8, 32          # K = 8*8*8 = 512
    kx2, kw2, kb2 = jax.random.split(jax.random.PRNGKey(1), 3)
    x2 = jax.random.normal(kx2, (B2, C2, IMG2, IMG2), dtype=jnp.float32)
    w2 = jax.random.normal(kw2, (EMBED2, C2, PATCH2, PATCH2), dtype=jnp.float32) * 0.02
    b2 = jax.random.normal(kb2, (EMBED2,), dtype=jnp.float32) * 0.02
    ref2 = torch_ref(x2, w2, b2, PATCH2)

    tok2, (hp2, wp2) = patch_embed(x2, w2, b2, PATCH2,
                                   compute_dtype=jnp.float32,
                                   out_dtype=jnp.float32,
                                   tk=128)                   # 4 K grid steps
    tok2 = jax.block_until_ready(tok2)
    assert tok2.shape == (B2, (IMG2 // PATCH2) ** 2, EMBED2)
    assert (hp2, wp2) == (IMG2 // PATCH2, IMG2 // PATCH2)
    assert jnp.allclose(tok2, ref2, atol=1e-3, rtol=1e-3)

    print("KERNEL_OK")
</pallas_src>

<mosaic_0001>
module attributes {stable_mosaic.version = 11 : i64} {
  func.func @_patch_embed_kernel(%arg0: i32, %arg1: memref<16x128xf32, #tpu.memory_space<vmem>>, %arg2: memref<128x128xf32, #tpu.memory_space<vmem>>, %arg3: memref<1x128xf32, #tpu.memory_space<vmem>>, %arg4: memref<16x128xf32, #tpu.memory_space<vmem>>) attributes {dimension_semantics = [#tpu.dimension_semantics<parallel>], iteration_bounds = array<i64: 2>, scalar_prefetch = 0 : i64, scratch_operands = 0 : i64, tpu.core_type = #tpu.core_type<tc>, window_params = [{transform_indices = @transform_0, window_bounds = array<i64: 16, 128>}, {pipeline_mode = #tpu.pipeline_mode<synchronous>, transform_indices = @transform_1, window_bounds = array<i64: 128, 128>}, {pipeline_mode = #tpu.pipeline_mode<synchronous>, transform_indices = @transform_2, window_bounds = array<i64: 1, 128>}, {transform_indices = @transform_3, window_bounds = array<i64: 16, 128>}]} {
    %c0 = arith.constant 0 : index
    %c0_0 = arith.constant 0 : index
    %0 = vector.load %arg1[%c0, %c0_0] : memref<16x128xf32, #tpu.memory_space<vmem>>, vector<16x128xf32>
    %c0_1 = arith.constant 0 : index
    %c0_2 = arith.constant 0 : index
    %1 = vector.load %arg2[%c0_1, %c0_2] : memref<128x128xf32, #tpu.memory_space<vmem>>, vector<128x128xf32>
    %cst = arith.constant dense<0.000000e+00> : vector<16x128xf32>
    %2 = tpu.matmul %0, %1, %cst {dimension_numbers = #tpu.dot_dimension_numbers<[1], [0], [0], [1], [0, 0, 1, 1], [], []>} : vector<16x128xf32>, vector<128x128xf32>, vector<16x128xf32> -> vector<16x128xf32>
    %c0_3 = arith.constant 0 : index
    %c0_4 = arith.constant 0 : index
    %3 = vector.load %arg3[%c0_3, %c0_4] : memref<1x128xf32, #tpu.memory_space<vmem>>, vector<1x128xf32>
    %4 = vector.broadcast %3 : vector<1x128xf32> to vector<16x128xf32>
    %5 = arith.addf %2, %4 : vector<16x128xf32>
    %c0_5 = arith.constant 0 : index
    %c0_6 = arith.constant 0 : index
    %6 = vector.load %arg4[%c0_5, %c0_6] : memref<16x128xf32, #tpu.memory_space<vmem>>, vector<16x128xf32>
    tpu.vector_store %arg4[%c0_5, %c0_6], %5 {strides = array<i32>} : memref<16x128xf32, #tpu.memory_space<vmem>>, vector<16x128xf32>,
    return
  }
  func.func @transform_0(%arg0: i32) -> (i32, i32) {
    %c0_i32 = arith.constant 0 : i32
    %c0_i32_0 = arith.constant 0 : i32
    return %arg0, %c0_i32 : i32, i32
  }
  func.func @transform_1(%arg0: i32) -> (i32, i32) {
    %c0_i32 = arith.constant 0 : i32
    %c0_i32_0 = arith.constant 0 : i32
    %c0_i32_1 = arith.constant 0 : i32
    return %c0_i32, %c0_i32_0 : i32, i32
  }
  func.func @transform_2(%arg0: i32) -> (i32, i32) {
    %c0_i32 = arith.constant 0 : i32
    %c0_i32_0 = arith.constant 0 : i32
    %c0_i32_1 = arith.constant 0 : i32
    return %c0_i32, %c0_i32_0 : i32, i32
  }
  func.func @transform_3(%arg0: i32) -> (i32, i32) {
    %c0_i32 = arith.constant 0 : i32
    %c0_i32_0 = arith.constant 0 : i32
    return %arg0, %c0_i32 : i32, i32
  }
}

</mosaic_0001>

<llo_original>
// kernel: tpu_custom_call.1
$region0: #{tpu_custom_call.1}
  #allocation0 [shape = 'u32[]', space=smem, size = 0x4, offset = 0x4, fixed_abs, tag = 'smem constant byte address 0x4 - core index']
  #allocation1 [shape = 'u32[72,128]{1,0:T(1,128)}', space=vmem, size = 0x9000, scoped, tag = 'internal scratch']
  %s0 = inlined_call_operand.hbm [shape: f32[32,128], index: 0, kind: input, shape index: {}]
  %s1 = inlined_call_operand.hbm [shape: f32[128,128], index: 1, kind: input, shape index: {}]
  %s2 = inlined_call_operand.vmem [shape: f32[1,128], index: 2, kind: input, shape index: {}]
  %s3 = inlined_call_operand.hbm [shape: f32[32,128], index: 3, kind: output, shape index: {}]
  %s4 = sld [smem:[#allocation0]]
  $region53: #{tpu_custom_call.1} parent=0
    _
  %s6 = ssub.s32 1, %s4
  %s7 = scalar_select 0, %s6, %s4
  $region1: #{tpu_custom_call.1} parent=0
    #allocation2 [shape = 'u8[16384]{0}', space=vmem, size = 0x4000, scoped, tag = 'input window, operand 0']
    #allocation3 [shape = 's32[2]{0}', space=sflag, size = 0x8, scoped, tag = 'scoped memory for tpu_custom_call.1']
    #allocation4 [shape = 's32[2]{0}', space=sflag, size = 0x8, scoped, tag = 'scoped memory for tpu_custom_call.1']
    #allocation5 [shape = 'u8[65536]{0}', space=vmem, size = 0x10000, scoped, tag = 'input window, operand 1, single buffered']
    #allocation6 [shape = 's32[1]{0}', space=sflag, size = 0x4, scoped, tag = 'scoped memory for tpu_custom_call.1']
    #allocation7 [shape = 'u8[16384]{0}', space=vmem, size = 0x4000, scoped, tag = 'output window, operand 0']
    %8 = vsyncpa [#allocation3], 0
    %s9 = scalar_lea.sflag [#allocation3], 1
    %10 = vsyncpa %s9, 0
    %11 = vsyncpa [#allocation6], 0
    %12 = vsyncpa [#allocation4], 0
    %s13 = scalar_lea.sflag [#allocation4], 1
    %14 = vsyncpa %s13, 0
    loop: start=0, step=1, limit=4
    $region2: #{tpu_custom_call.1} parent=1 // loop_pre_header
      _
    $region3: #{tpu_custom_call.1} parent=1 // loop_header
      %s16 = sphi 0, %s20
      %p17 = scmp.ge.s32.totalorder %s16, 4
      %s26 = sphi 0, %s28
      %s29 = sphi 0, %s26
      %s30 = sphi 0, %s29
      %s46 = sphi 0, %s30
      %s50 = sphi 0, %s50
      %s52 = sphi 0, %s50
      %s53 = sphi 0, %s52
      %s67 = sphi 0, %s53
      %s71 = sphi 0, %s71
      %s73 = sphi 0, %s71
      %s74 = sphi 0, %s73
      %s88 = sphi 0, %s74
      %s94 = sphi 0, %s96
      %s97 = sphi 0, %s94
      %s98 = sphi 0, %s97
      %s114 = sphi 0, %s98
    $region4: #{tpu_custom_call.1} parent=1 // loop_header_branch
      %19 = sbr.rel (%p17) target = $region8
    $region5: #{tpu_custom_call.1} parent=1 // loop_body
      %s21 = ssub.s32 %s16, 1
      %s22 = ssub.s32 %s16, 2
      %s23 = sadd.s32 %s16, 1
      %s24 = ssub.s32 %s16, %s23
      %p25 = scmp.eq.s32.totalorder %s24, 0
      %s27 = sadd.s32 %s26, 1
      %s28 = scalar_select %p25, %s26, %s27
      %p31 = pneg %p25
      %p32 = scmp.eq.s32.totalorder %s16, 1
      %p33 = por %p31, %p32
      %p34 = scmp.ne.s32.totalorder %s26, %s29
      %p35 = scmp.eq.s32.totalorder %s16, 0
      %p36 = por %p34, %p35
      %p37 = scmp.ne.s32.totalorder %s26, %s29
      %p38 = scmp.eq.s32.totalorder %s21, 1
      %p39 = por %p37, %p38
      %p40 = scmp.ne.s32.totalorder %s29, %s30
      %p41 = scmp.eq.s32.totalorder %s21, 0
      %p42 = por %p40, %p41
      %p43 = scmp.ne.s32.totalorder %s29, %s30
      %p44 = scmp.eq.s32.totalorder %s22, 1
      %p45 = por %p43, %p44
      %p47 = scmp.ne.s32.totalorder %s30, %s46
      %p48 = scmp.eq.s32.totalorder %s22, 0
      %p49 = por %p47, %p48
      %s51 = sadd.s32 %s50, 1
      %p54 = scmp.eq.s32.totalorder %s16, 1
      %p55 = scmp.ne.s32.totalorder %s50, %s52
      %p56 = scmp.eq.s32.totalorder %s16, 0
      %p57 = por %p55, %p56
      %p58 = scmp.ne.s32.totalorder %s50, %s52
      %p59 = scmp.eq.s32.totalorder %s21, 1
      %p60 = por %p58, %p59
      %p61 = scmp.ne.s32.totalorder %s52, %s53
      %p62 = scmp.eq.s32.totalorder %s21, 0
      %p63 = por %p61, %p62
      %p64 = scmp.ne.s32.totalorder %s52, %s53
      %p65 = scmp.eq.s32.totalorder %s22, 1
      %p66 = por %p64, %p65
      %p68 = scmp.ne.s32.totalorder %s53, %s67
      %p69 = scmp.eq.s32.totalorder %s22, 0
      %p70 = por %p68, %p69
      %s72 = sadd.s32 %s71, 1
      %p75 = scmp.eq.s32.totalorder %s16, 1
      %p76 = scmp.ne.s32.totalorder %s71, %s73
      %p77 = scmp.eq.s32.totalorder %s16, 0
      %p78 = por %p76, %p77
      %p79 = scmp.ne.s32.totalorder %s71, %s73
      %p80 = scmp.eq.s32.totalorder %s21, 1
      %p81 = por %p79, %p80
      %p82 = scmp.ne.s32.totalorder %s73, %s74
      %p83 = scmp.eq.s32.totalorder %s21, 0
      %p84 = por %p82, %p83
      %p85 = scmp.ne.s32.totalorder %s73, %s74
      %p86 = scmp.eq.s32.totalorder %s22, 1
      %p87 = por %p85, %p86
      %p89 = scmp.ne.s32.totalorder %s74, %s88
      %p90 = scmp.eq.s32.totalorder %s22, 0
      %p91 = por %p89, %p90
      %s92 = ssub.s32 %s16, %s23
      %p93 = scmp.eq.s32.totalorder %s92, 0
      %s95 = sadd.s32 %s94, 1
      %s96 = scalar_select %p93, %s94, %s95
      %p99 = pneg %p93
      %p100 = scmp.eq.s32.totalorder %s16, 1
      %p101 = por %p99, %p100
      %p102 = scmp.ne.s32.totalorder %s94, %s97
      %p103 = scmp.eq.s32.totalorder %s16, 0
      %p104 = por %p102, %p103
      %p105 = scmp.ne.s32.totalorder %s94, %s97
      %p106 = scmp.eq.s32.totalorder %s21, 1
      %p107 = por %p105, %p106
      %p108 = scmp.ne.s32.totalorder %s97, %s98
      %p109 = scmp.eq.s32.totalorder %s21, 0
      %p110 = por %p108, %p109
      %p111 = scmp.ne.s32.totalorder %s97, %s98
      %p112 = scmp.eq.s32.totalorder %s22, 1
      %p113 = por %p111, %p112
      %p115 = scmp.ne.s32.totalorder %s98, %s114
      %p116 = scmp.eq.s32.totalorder %s22, 0
      %p117 = por %p115, %p116
      %p118 = scmp.le.s32.totalorder 1, %s16
      %p119 = scmp.lt.s32.totalorder %s16, 3
      %p120 = pnand %p118, %p119
      %p121 = pneg %p120
      // Predicated region
      $region9: #{tpu_custom_call.1} parent=5 // pred_check
        _
      $region10: #{tpu_custom_call.1} parent=5 // pred_check_branch
        %123 = sbr.rel (%p120) target = $region12
      $region11: #{tpu_custom_call.1} parent=5 // pred_region
        %s124 = ssub.s32 %s16, 1
        // Predicated region
        $region13: #{tpu_custom_call.1} parent=11 // pred_check
          %p125 = pneg %p63
        $region14: #{tpu_custom_call.1} parent=11 // pred_check_branch
          %127 = sbr.rel (%p125) target = $region16
        $region15: #{tpu_custom_call.1} parent=11 // pred_region
          %129 = vsyncadd [#allocation6], 0
          %s130 = sshll.u32 %s1, 4
          %s131 = int_to_ptr.hbm [resolvable:$true] %s130
          %s132 = sshll.u32 [#allocation5], 4
          %s133 = int_to_ptr.vmem [resolvable:$true] %s132
          %138 = dma.hbm_to_vmem [thread:$0]  %s131, 2048, %s133, [#allocation6], 128, 128, 8
        $region16: #{tpu_custom_call.1} parent=11 // pred_fallthru
          _
        // Predicated region
        $region17: #{tpu_custom_call.1} parent=11 // pred_check
          %p139 = pneg %p84
        $region18: #{tpu_custom_call.1} parent=11 // pred_check_branch
          %141 = sbr.rel (%p139) target = $region20
        $region19: #{tpu_custom_call.1} parent=11 // pred_region
          _
        $region20: #{tpu_custom_call.1} parent=11 // pred_fallthru
          _
      $region12: #{tpu_custom_call.1} parent=5 // pred_fallthru
        _
      %p142 = scmp.lt.s32.totalorder %s16, 2
      // Predicated region
      $region21: #{tpu_custom_call.1} parent=5 // pred_check
        %p143 = pneg %p142
      $region22: #{tpu_custom_call.1} parent=5 // pred_check_branch
        %145 = sbr.rel (%p143) target = $region24
      $region23: #{tpu_custom_call.1} parent=5 // pred_region
        // Predicated region
        $region25: #{tpu_custom_call.1} parent=23 // pred_check
          %p146 = pneg %p36
        $region26: #{tpu_custom_call.1} parent=23 // pred_check_branch
          %148 = sbr.rel (%p146) target = $region28
        $region27: #{tpu_custom_call.1} parent=23 // pred_region
          %s149 = sand.u32 %s26, 1
          %s150 = scalar_lea.sflag [#allocation3], %s149
          %s151 = sand.u32 %s26, 1
          %s152 = smul.addr %s151, 16
          %s153 = scalar_lea.vmem [#allocation2], %s152
          %s154 = smul.u32 2, %s16
          %156 = vsyncadd %s150, 0
          %s157 = smul.addr %s154, 8
          %s158 = scalar_lea.hbm %s0, %s157
          %s159 = sshll.u32 %s158, 4
          %s160 = int_to_ptr.hbm [resolvable:$true] %s159
          %s161 = sshll.u32 %s153, 4
          %s162 = int_to_ptr.vmem [resolvable:$true] %s161
          %167 = dma.hbm_to_vmem [thread:$0]  %s160, 256, %s162, %s150, 128, 128, 8
        $region28: #{tpu_custom_call.1} parent=23 // pred_fallthru
          _
      $region24: #{tpu_custom_call.1} parent=5 // pred_fallthru
        _
      %p168 = scmp.le.s32.totalorder 1, %s16
      %p169 = scmp.lt.s32.totalorder %s16, 3
      %p170 = pnand %p168, %p169
      %p171 = pneg %p170
      // Predicated region
      $region29: #{tpu_custom_call.1} parent=5 // pred_check
        _
      $region30: #{tpu_custom_call.1} parent=5 // pred_check_branch
        %173 = sbr.rel (%p170) target = $region32
      $region31: #{tpu_custom_call.1} parent=5 // pred_region
        %s174 = ssub.s32 %s16, 1
        %s175 = sand.u32 %s29, 1
        %s176 = scalar_lea.sflag [#allocation3], %s175
        %s177 = sand.u32 %s29, 1
        %s178 = smul.addr %s177, 16
        %s179 = scalar_lea.vmem [#allocation2], %s178
        // Predicated region
        $region33: #{tpu_custom_call.1} parent=31 // pred_check
          %p180 = pneg %p42
        $region34: #{tpu_custom_call.1} parent=31 // pred_check_branch
          %182 = sbr.rel (%p180) target = $region36
        $region35: #{tpu_custom_call.1} parent=31 // pred_region
          %184 = dma.done %s176, 256
        $region36: #{tpu_custom_call.1} parent=31 // pred_fallthru
          _
        // Predicated region
        $region37: #{tpu_custom_call.1} parent=31 // pred_check
          %p185 = pneg %p63
        $region38: #{tpu_custom_call.1} parent=31 // pred_check_branch
          %187 = sbr.rel (%p185) target = $region40
        $region39: #{tpu_custom_call.1} parent=31 // pred_region
          %189 = dma.done [#allocation6], 2048
        $region40: #{tpu_custom_call.1} parent=31 // pred_fallthru
          _
        %s190 = sand.u32 %s29, 1
        %s191 = scalar_lea.sflag [#allocation3], %s190
        %s192 = sand.u32 %s29, 1
        %s193 = smul.addr %s192, 16
        %s194 = scalar_lea.vmem [#allocation2], %s193
        %p195 = pneg %p42
        %p196 = pneg %p39
        %p197 = pneg %p63
        %p198 = pneg %p60
        %p199 = pneg %p84
        %p200 = pneg %p81
        %p201 = pneg %p110
        %p202 = pneg %p107
        %s203 = sand.u32 %s97, 1
        %s204 = scalar_lea.sflag [#allocation4], %s203
        %s205 = sand.u32 %s97, 1
        %s206 = smul.addr %s205, 16
        %s207 = scalar_lea.vmem [#allocation7], %s206
        %s208 = smul.u32 2, %s21
        %s209 = smul.u32 2, %s21
        %v210 = vld [vmem:[%s179] sm:$0xff]
        %v211 = vld [vmem:[%s179 + $0x8] sm:$0xff]
        %v212 = vld [vmem:[#allocation5] sm:$0xff]
        %v213 = vld [vmem:[#allocation5 + $0x8] sm:$0xff]
        %v214 = vld [vmem:[#allocation5 + $0x10] sm:$0xff]
        %v215 = vld [vmem:[#allocation5 + $0x18] sm:$0xff]
        %v216 = vld [vmem:[#allocation5 + $0x20] sm:$0xff]
        %v217 = vld [vmem:[#allocation5 + $0x28] sm:$0xff]
        %v218 = vld [vmem:[#allocation5 + $0x30] sm:$0xff]
        %v219 = vld [vmem:[#allocation5 + $0x38] sm:$0xff]
        %v220 = vld [vmem:[#allocation5 + $0x40] sm:$0xff]
        %v221 = vld [vmem:[#allocation5 + $0x48] sm:$0xff]
        %v222 = vld [vmem:[#allocation5 + $0x50] sm:$0xff]
        %v223 = vld [vmem:[#allocation5 + $0x58] sm:$0xff]
        %v224 = vld [vmem:[#allocation5 + $0x60] sm:$0xff]
        %v225 = vld [vmem:[#allocation5 + $0x68] sm:$0xff]
        %v226 = vld [vmem:[#allocation5 + $0x70] sm:$0xff]
        %v227 = vld [vmem:[#allocation5 + $0x78] sm:$0xff]
        %v228 = vld [vmem:[%s2] sm:$0x1]
        %v230 = vperm.slane %v228, 0
        %232 = vmatpush.msra.mxu0 %v227
        %233 = vmatpush.msra.mxu0 %v226
        %234 = vmatpush.msra.mxu0 %v225
        %235 = vmatpush.msra.mxu0 %v224
        %236 = vmatpush.msra.mxu0 %v223
        %237 = vmatpush.msra.mxu0 %v222
        %238 = vmatpush.msra.mxu0 %v221
        %239 = vmatpush.msra.mxu0 %v220
        %240 = vmatpush.msra.mxu0 %v219
        %241 = vmatpush.msra.mxu0 %v218
        %242 = vmatpush.msra.mxu0 %v217
        %243 = vmatpush.msra.mxu0 %v216
        %244 = vmatpush.msra.mxu0 %v215
        %245 = vmatpush.msra.mxu0 %v214
        %246 = vmatpush.msra.mxu0 %v213
        %247 = vmatpush.msra.mxu0 %v212
        %248 = vmatmul.f32.gmra.mxu0 %v210
        %v249 = vpop.f32.mrf.mxu0
        %v250 = vadd.f32 %v230, %v249
        %251 = vmatmul.f32.gmra.mxu0 %v211
        %v252 = vpop.f32.mrf.mxu0
        %v253 = vadd.f32 %v230, %v252
        %254 = vdwg.mxu0
        %255 = vst [vmem:[%s207] sm:$0xff] %v250
        %256 = vst [vmem:[%s207 + $0x8] sm:$0xff] %v253
        %s257 = sand.u32 %s97, 1
        %s258 = scalar_lea.sflag [#allocation4], %s257
        %s259 = sand.u32 %s97, 1
        %s260 = smul.addr %s259, 16
        %s261 = scalar_lea.vmem [#allocation7], %s260
        // Predicated region
        $region41: #{tpu_custom_call.1} parent=31 // pred_check
          %p262 = pneg %p107
        $region42: #{tpu_custom_call.1} parent=31 // pred_check_branch
          %264 = sbr.rel (%p262) target = $region44
        $region43: #{tpu_custom_call.1} parent=31 // pred_region
          %s265 = smul.u32 2, %s21
          %267 = vsyncadd %s258, 0
          %s268 = smul.addr %s265, 8
          %s269 = scalar_lea.hbm %s3, %s268
          %s270 = sshll.u32 %s261, 4
          %s271 = int_to_ptr.vmem [resolvable:$true] %s270
          %s272 = sshll.u32 %s269, 4
          %s273 = int_to_ptr.hbm [resolvable:$true] %s272
          %278 = dma.vmem_to_hbm [thread:$0]  %s271, 256, %s273, %s258, 128, 128, 8
        $region44: #{tpu_custom_call.1} parent=31 // pred_fallthru
          _
      $region32: #{tpu_custom_call.1} parent=5 // pred_fallthru
        _
      %p279 = scmp.le.s32.totalorder 2, %s16
      // Predicated region
      $region45: #{tpu_custom_call.1} parent=5 // pred_check
        %p280 = pneg %p279
      $region46: #{tpu_custom_call.1} parent=5 // pred_check_branch
        %282 = sbr.rel (%p280) target = $region48
      $region47: #{tpu_custom_call.1} parent=5 // pred_region
        %s283 = ssub.s32 %s16, 2
        // Predicated region
        $region49: #{tpu_custom_call.1} parent=47 // pred_check
          %p284 = pneg %p113
        $region50: #{tpu_custom_call.1} parent=47 // pred_check_branch
          %286 = sbr.rel (%p284) target = $region52
        $region51: #{tpu_custom_call.1} parent=47 // pred_region
          %s287 = sand.u32 %s98, 1
          %s288 = scalar_lea.sflag [#allocation4], %s287
          %s289 = sand.u32 %s98, 1
          %s290 = smul.addr %s289, 16
          %s291 = scalar_lea.vmem [#allocation7], %s290
          %293 = dma.done %s288, 256
        $region52: #{tpu_custom_call.1} parent=47 // pred_fallthru
          _
      $region48: #{tpu_custom_call.1} parent=5 // pred_fallthru
        _
    $region6: #{tpu_custom_call.1} parent=1 // loop_footer
      %s20 = sadd.s32 1, %s16
    $region7: #{tpu_custom_call.1} parent=1 // loop_footer_branch
      %15 = sbr.rel target = $region3
    $region8: #{tpu_custom_call.1} parent=1 // loop_exit
      _
    %294 = vsyncpa [#allocation3], 1
    %s295 = scalar_lea.sflag [#allocation3], 1
    %296 = vsyncpa %s295, 1
    %297 = vsyncpa [#allocation6], 1
    %298 = vsyncpa [#allocation4], 1
    %s299 = scalar_lea.sflag [#allocation4], 1
    %300 = vsyncpa %s299, 1

</llo_original>
